<compile_context>
chip_gen: v6e
topology: v6e:2x2x1
jax: 0.10.0
libtpu: 0.0.40
codegen_flags: <defaults>
</compile_context>

<pallas_src>
import functools
import math

import jax
import jax.numpy as jnp
from jax import lax
from jax.experimental import pallas as pl
from jax.experimental.pallas import tpu as pltpu


# ----------------------------- Pallas kernel --------------------------------
def _span_attn_kernel(q_ref, kT_ref, mq_ref, mk_ref, rel_ref, st_ref, ed_ref):
    TQ = q_ref.shape[1]
    S = kT_ref.shape[2]
    H = q_ref.shape[2] // 2
    V = rel_ref.shape[1] // 2
    R = (V - 1) // 2
    qi = pl.program_id(1)

    q_all = q_ref[0]                       # (TQ, 2H) bf16, 1/sqrt(H) pre-folded
    kT = kT_ref[0]                         # (2H, S)  bf16, pre-transposed

    # Content scores on the MXU: (TQ,H) @ (H,S) -> (TQ,S) f32, one per head.
    scores_st = jnp.dot(q_all[:, :H], kT[:H], preferred_element_type=jnp.float32)
    scores_ed = jnp.dot(q_all[:, H:], kT[H:], preferred_element_type=jnp.float32)

    # Relative-position logits for BOTH heads in one small matmul:
    # (TQ,2H) @ blockdiag(rel_st^T, rel_ed^T) (2H,2V) -> (TQ,2V) f32.
    rel_logits = jnp.dot(q_all, rel_ref[...], preferred_element_type=jnp.float32)

    # Additive mask shared by both heads: -1e18 where either token is padding.
    mq = mq_ref[0]                         # (TQ, 1) sublane-oriented
    mk = mk_ref[0]                         # (1, S)  lane-oriented
    add_mask = jnp.where((mq * mk) == 0.0, jnp.float32(-1e18), jnp.float32(0.0))

    # Signed relative distance d = j - i for this query tile.  The clip to
    # [-R, R] is folded into the edge thresholds of the select tree below.
    row = lax.broadcasted_iota(jnp.int32, (TQ, S), 0) + qi * TQ
    col = lax.broadcasted_iota(jnp.int32, (TQ, S), 1)
    d = col - row

    # Balanced select tree over the V clipped-distance classes.  Threshold
    # compares are SHARED between the two heads: V-1 compares + (V-1) selects
    # per head, accumulated into the scores with a single add per head.
    def build(lo, hi):
        if hi - lo == 1:
            return rel_logits[:, lo:lo + 1], rel_logits[:, V + lo:V + lo + 1]
        mid = (lo + hi) // 2
        take_right = d >= (mid - R)        # shared between heads
        l_st, l_ed = build(lo, mid)
        r_st, r_ed = build(mid, hi)
        return (jnp.where(take_right, r_st, l_st),
                jnp.where(take_right, r_ed, l_ed))

    bias_st, bias_ed = build(0, V)

    scores_st = scores_st + bias_st + add_mask
    scores_ed = scores_ed + bias_ed + add_mask

    def softmax_store(scores, out_ref):
        scores = scores - jnp.max(scores, axis=-1, keepdims=True)
        p = jnp.exp(scores)
        denom = jnp.sum(p, axis=-1, keepdims=True)
        # exact reciprocal: each row sums to 1 (EUP op, not the bottleneck)
        out_ref[0] = (p * pl.reciprocal(denom)).astype(out_ref.dtype)

    softmax_store(scores_st, st_ref)
    softmax_store(scores_ed, ed_ref)


# ----------------------- tile / VMEM sizing helpers --------------------------
def _vmem_capacity_bytes():
    try:
        return int(pltpu.get_tpu_info().vmem_capacity_bytes)
    except Exception:
        return 64 << 20        # conservative default (v7x per-core VMEM)


def _vmem_estimate(tq, S, H, out_bytes):
    out_bufs = 2 * 2 * tq * S * out_bytes       # two outputs, double-buffered
    q_in = 2 * tq * (2 * H) * 2                 # bf16 Q block, double-buffered
    k_in = 2 * (2 * H) * S * 2                  # bf16 K^T block, double-buffered
    masks = 2 * 4 * (tq + S)
    rel = 2 * (2 * H) * 128 * 2                 # tiny, lane-padded
    temps = 6 * tq * S * 4                      # live f32 (TQ,S) temporaries
    return out_bufs + q_in + k_in + masks + rel + temps


def _choose_query_tile(S, H, out_bytes, vmem_cap):
    budget = int(0.7 * vmem_cap)
    # Candidates: divisors of S that are multiples of 8 (layout-legal), capped
    # at 512 (per-step overhead is already amortized there), plus S itself for
    # small S (a full-dim block is always layout-legal).
    cands = [t for t in range(8, min(S, 512) + 1, 8) if S % t == 0]
    if S <= 512:
        cands.append(S)
    cands = sorted(set(cands), reverse=True)
    for t in cands:
        if _vmem_estimate(t, S, H, out_bytes) <= budget:
            return t
    # TODO(synk): no multiple-of-8 divisor of S fits the VMEM budget; fall back
    # to the smallest legal tile (may spill) rather than an unbounded TQ=S block.
    return cands[-1] if cands else S


# ------------------------------- wrapper -------------------------------------
@functools.partial(jax.jit, static_argnames=("max_relative_position", "out_dtype"))
def span_classifier_forward(repre, mask, params, *, max_relative_position,
                            out_dtype=jnp.float32):
    """repre: [B,S,H] float, mask: [B,S] (1=valid, 0=pad). Returns (st, ed): [B,S,S]."""
    B, S, H = repre.shape
    R = max_relative_position
    V = 2 * R + 1
    scale = 1.0 / math.sqrt(H)

    x = repre.astype(jnp.float32)

    # Hoisted fused Q/K projections (negligible vs the O(B*S^2*H) kernel work);
    # the 1/sqrt(H) scale is folded into Q so it also scales the rel-bias path.
    wq = jnp.concatenate([params["wq_st"], params["wq_ed"]], axis=1)      # (H, 2H)
    bq = jnp.concatenate([params["bq_st"], params["bq_ed"]])              # (2H,)
    wk = jnp.concatenate([params["wk_st"], params["wk_ed"]], axis=1)      # (H, 2H)
    bk = jnp.concatenate([params["bk_st"], params["bk_ed"]])              # (2H,)
    q_all = ((x @ wq + bq) * scale).astype(jnp.bfloat16)                  # (B, S, 2H)
    k_t = jnp.swapaxes(x @ wk + bk, 1, 2).astype(jnp.bfloat16)            # (B, 2H, S)

    # Block-diagonal of the two transposed relative tables -> (2H, 2V).
    zeros = jnp.zeros((H, V), jnp.float32)
    rel_blk = jnp.concatenate(
        [jnp.concatenate([params["rel_emb_st"].T, zeros], axis=1),
         jnp.concatenate([zeros, params["rel_emb_ed"].T], axis=1)],
        axis=0).astype(jnp.bfloat16)

    mask_q = mask.reshape(B, S, 1).astype(jnp.float32)   # sublane-oriented
    mask_k = mask.reshape(B, 1, S).astype(jnp.float32)   # lane-oriented

    out_bytes = jnp.dtype(out_dtype).itemsize
    vmem_cap = _vmem_capacity_bytes()
    TQ = _choose_query_tile(S, H, out_bytes, vmem_cap)
    NQ = S // TQ
    est = _vmem_estimate(TQ, S, H, out_bytes)
    vmem_limit = int(min(int(0.9 * vmem_cap), max(32 << 20, est + (16 << 20))))

    grid_spec = pltpu.PrefetchScalarGridSpec(
        num_scalar_prefetch=0,
        grid=(B, NQ),
        in_specs=[
            pl.BlockSpec((1, TQ, 2 * H), lambda b, q: (b, q, 0)),   # Q (both heads)
            pl.BlockSpec((1, 2 * H, S), lambda b, q: (b, 0, 0)),    # K^T (both heads)
            pl.BlockSpec((1, TQ, 1), lambda b, q: (b, q, 0)),       # query mask
            pl.BlockSpec((1, 1, S), lambda b, q: (b, 0, 0)),        # key mask
            pl.BlockSpec((2 * H, 2 * V), lambda b, q: (0, 0)),      # rel tables
        ],
        out_specs=[
            pl.BlockSpec((1, TQ, S), lambda b, q: (b, q, 0)),
            pl.BlockSpec((1, TQ, S), lambda b, q: (b, q, 0)),
        ],
    )

    flops = 4 * B * S * S * H + 2 * B * S * (2 * H) * (2 * V)
    cost = pl.CostEstimate(
        flops=flops,
        transcendentals=2 * B * S * S,
        bytes_accessed=2 * B * S * S * out_bytes + 2 * B * S * 2 * H * 2 + 2 * B * S * 4)

    st, ed = pl.pallas_call(
        _span_attn_kernel,
        out_shape=(jax.ShapeDtypeStruct((B, S, S), out_dtype),
                   jax.ShapeDtypeStruct((B, S, S), out_dtype)),
        grid_spec=grid_spec,
        compiler_params=pltpu.CompilerParams(
            dimension_semantics=("parallel", "parallel"),
            vmem_limit_bytes=vmem_limit),
        cost_estimate=cost,
    )(q_all, k_t, mask_q, mask_k, rel_blk)
    return st, ed


# ------------------------- plain-JAX reference (check) ----------------------
def _relative_positions_matrix(length, max_rel):
    r = jnp.arange(length)
    dist = r[None, :] - r[:, None]                 # [i, j] = j - i
    dist = jnp.clip(dist, -max_rel, max_rel)
    return dist + max_rel                          # indices in [0, 2*max_rel]


def reference_forward(repre, mask, params, max_relative_position):
    B, S, H = repre.shape
    valid = mask[:, :, None] * mask[:, None, :]
    rel_idx = _relative_positions_matrix(S, max_relative_position)

    def one(wq, bq, wk, bk, rel_emb):
        relk = rel_emb[rel_idx]                    # (S, S, H)
        q = repre @ wq + bq
        k = repre @ wk + bk
        q = q / jnp.sqrt(jnp.float32(H))
        scores = jnp.einsum("bid,bjd->bij", q, k)
        scores = scores + jnp.einsum("bid,ijd->bij", q, relk)
        scores = jnp.where(valid == 0.0, -1e18, scores)
        scores = scores - jnp.max(scores, axis=-1, keepdims=True)
        p = jnp.exp(scores)
        return p / jnp.sum(p, axis=-1, keepdims=True)

    st = one(params["wq_st"], params["bq_st"], params["wk_st"], params["bk_st"],
             params["rel_emb_st"])
    ed = one(params["wq_ed"], params["bq_ed"], params["wk_ed"], params["bk_ed"],
             params["rel_emb_ed"])
    return st, ed


# --------------------------------- main --------------------------------------
def make_params(key, hidden_dim, max_relative_position):
    ks = jax.random.split(key, 10)
    H, V = hidden_dim, 2 * max_relative_position + 1
    scale = 0.1
    p = {
        "wq_st": scale * jax.random.normal(ks[0], (H, H), jnp.float32),
        "bq_st": scale * jax.random.normal(ks[1], (H,), jnp.float32),
        "wk_st": scale * jax.random.normal(ks[2], (H, H), jnp.float32),
        "bk_st": scale * jax.random.normal(ks[3], (H,), jnp.float32),
        "wq_ed": scale * jax.random.normal(ks[4], (H, H), jnp.float32),
        "bq_ed": scale * jax.random.normal(ks[5], (H,), jnp.float32),
        "wk_ed": scale * jax.random.normal(ks[6], (H, H), jnp.float32),
        "bk_ed": scale * jax.random.normal(ks[7], (H,), jnp.float32),
        # each MultiHeadedAttention owns its relative-position embedding table
        "rel_emb_st": scale * jax.random.normal(ks[8], (V, H), jnp.float32),
        "rel_emb_ed": scale * jax.random.normal(ks[9], (V, H), jnp.float32),
        # LayerNorm params exist in the PyTorch module but are never used in forward().
        "ln_gamma": jnp.ones((H,), jnp.float32),
        "ln_beta": jnp.zeros((H,), jnp.float32),
    }
    return p


if __name__ == "__main__":
    B, S, H = 2, 8, 128
    MAX_REL = 4

    key = jax.random.PRNGKey(0)
    k_x, k_p = jax.random.split(key)
    repre = jax.random.normal(k_x, (B, S, H), jnp.float32)
    # mask: batch 0 fully valid, batch 1 has 5 valid tokens then padding
    mask = jnp.stack([jnp.ones((S,), jnp.float32),
                      jnp.concatenate([jnp.ones((5,), jnp.float32),
                                       jnp.zeros((S - 5,), jnp.float32)])])
    params = make_params(k_p, H, MAX_REL)

    st, ed = span_classifier_forward(repre, mask, params,
                                     max_relative_position=MAX_REL)
    jax.block_until_ready((st, ed))

    st_ref, ed_ref = reference_forward(repre, mask, params, MAX_REL)
    assert st.shape == (B, S, S) and ed.shape == (B, S, S)
    # kernel uses bf16 MXU operands -> slightly looser tolerance than pure f32
    assert jnp.allclose(st, st_ref, atol=3e-2, rtol=3e-2)
    assert jnp.allclose(ed, ed_ref, atol=3e-2, rtol=3e-2)
    # each row is a probability distribution over positions
    assert jnp.allclose(jnp.sum(st, axis=-1), 1.0, atol=1e-2)
    assert jnp.allclose(jnp.sum(ed, axis=-1), 1.0, atol=1e-2)

    print("KERNEL_OK")
</pallas_src>

<mosaic_0001>
module attributes {stable_mosaic.version = 11 : i64} {
  func.func @_span_attn_kernel(%arg0: i32, %arg1: i32, %arg2: memref<1x8x256xbf16, #tpu.memory_space<vmem>>, %arg3: memref<1x256x8xbf16, #tpu.memory_space<vmem>>, %arg4: memref<1x8x1xf32, #tpu.memory_space<vmem>>, %arg5: memref<1x1x8xf32, #tpu.memory_space<vmem>>, %arg6: memref<256x18xbf16, #tpu.memory_space<vmem>>, %arg7: memref<1x8x8xf32, #tpu.memory_space<vmem>>, %arg8: memref<1x8x8xf32, #tpu.memory_space<vmem>>) attributes {dimension_semantics = [#tpu.dimension_semantics<parallel>, #tpu.dimension_semantics<parallel>], iteration_bounds = array<i64: 2, 1>, scalar_prefetch = 0 : i64, scratch_operands = 0 : i64, tpu.core_type = #tpu.core_type<tc>, window_params = [{transform_indices = @transform_0, window_bounds = array<i64: 1, 8, 256>}, {transform_indices = @transform_1, window_bounds = array<i64: 1, 256, 8>}, {transform_indices = @transform_2, window_bounds = array<i64: 1, 8, 1>}, {transform_indices = @transform_3, window_bounds = array<i64: 1, 1, 8>}, {pipeline_mode = #tpu.pipeline_mode<synchronous>, transform_indices = @transform_4, window_bounds = array<i64: 256, 18>}, {transform_indices = @transform_5, window_bounds = array<i64: 1, 8, 8>}, {transform_indices = @transform_6, window_bounds = array<i64: 1, 8, 8>}]} {
    %c0 = arith.constant 0 : index
    %c0_0 = arith.constant 0 : index
    %c0_1 = arith.constant 0 : index
    %0 = vector.load %arg2[%c0, %c0_0, %c0_1] : memref<1x8x256xbf16, #tpu.memory_space<vmem>>, vector<1x8x256xbf16>
    %1 = vector.shape_cast %0 : vector<1x8x256xbf16> to vector<8x256xbf16>
    %c0_2 = arith.constant 0 : index
    %c0_3 = arith.constant 0 : index
    %c0_4 = arith.constant 0 : index
    %2 = vector.load %arg3[%c0_2, %c0_3, %c0_4] : memref<1x256x8xbf16, #tpu.memory_space<vmem>>, vector<1x256x8xbf16>
    %3 = vector.shape_cast %2 : vector<1x256x8xbf16> to vector<256x8xbf16>
    %4 = vector.extract_strided_slice %1 {offsets = [0, 0], sizes = [8, 128], strides = [1, 1]} : vector<8x256xbf16> to vector<8x128xbf16>
    %5 = vector.extract_strided_slice %3 {offsets = [0, 0], sizes = [128, 8], strides = [1, 1]} : vector<256x8xbf16> to vector<128x8xbf16>
    %cst = arith.constant dense<0.000000e+00> : vector<8x8xf32>
    %6 = tpu.matmul %4, %5, %cst {dimension_numbers = #tpu.dot_dimension_numbers<[1], [0], [0], [1], [0, 0, 1, 1], [], []>} : vector<8x128xbf16>, vector<128x8xbf16>, vector<8x8xf32> -> vector<8x8xf32>
    %7 = vector.extract_strided_slice %1 {offsets = [0, 128], sizes = [8, 128], strides = [1, 1]} : vector<8x256xbf16> to vector<8x128xbf16>
    %8 = vector.extract_strided_slice %3 {offsets = [128, 0], sizes = [128, 8], strides = [1, 1]} : vector<256x8xbf16> to vector<128x8xbf16>
    %cst_5 = arith.constant dense<0.000000e+00> : vector<8x8xf32>
    %9 = tpu.matmul %7, %8, %cst_5 {dimension_numbers = #tpu.dot_dimension_numbers<[1], [0], [0], [1], [0, 0, 1, 1], [], []>} : vector<8x128xbf16>, vector<128x8xbf16>, vector<8x8xf32> -> vector<8x8xf32>
    %c0_6 = arith.constant 0 : index
    %c0_7 = arith.constant 0 : index
    %10 = vector.load %arg6[%c0_6, %c0_7] : memref<256x18xbf16, #tpu.memory_space<vmem>>, vector<256x18xbf16>
    %cst_8 = arith.constant dense<0.000000e+00> : vector<8x18xf32>
    %11 = tpu.matmul %1, %10, %cst_8 {dimension_numbers = #tpu.dot_dimension_numbers<[1], [0], [0], [1], [0, 0, 1, 1], [], []>} : vector<8x256xbf16>, vector<256x18xbf16>, vector<8x18xf32> -> vector<8x18xf32>
    %c0_9 = arith.constant 0 : index
    %c0_10 = arith.constant 0 : index
    %c0_11 = arith.constant 0 : index
    %12 = vector.load %arg4[%c0_9, %c0_10, %c0_11] : memref<1x8x1xf32, #tpu.memory_space<vmem>>, vector<1x8x1xf32>
    %13 = vector.shape_cast %12 : vector<1x8x1xf32> to vector<8x1xf32>
    %c0_12 = arith.constant 0 : index
    %c0_13 = arith.constant 0 : index
    %c0_14 = arith.constant 0 : index
    %14 = vector.load %arg5[%c0_12, %c0_13, %c0_14] : memref<1x1x8xf32, #tpu.memory_space<vmem>>, vector<1x1x8xf32>
    %15 = vector.shape_cast %14 : vector<1x1x8xf32> to vector<1x8xf32>
    %16 = vector.broadcast %13 : vector<8x1xf32> to vector<8x8xf32>
    %17 = vector.broadcast %15 : vector<1x8xf32> to vector<8x8xf32>
    %18 = arith.mulf %16, %17 : vector<8x8xf32>
    %cst_15 = arith.constant 0.000000e+00 : f32
    %19 = vector.broadcast %cst_15 : f32 to vector<8x8xf32>
    %20 = arith.cmpf oeq, %18, %19 : vector<8x8xf32>
    %cst_16 = arith.constant -9.99999984E+17 : f32
    %cst_17 = arith.constant 0.000000e+00 : f32
    %21 = vector.broadcast %cst_16 : f32 to vector<8x8xf32>
    %22 = vector.broadcast %cst_17 : f32 to vector<8x8xf32>
    %23 = arith.select %20, %21, %22 : vector<8x8xi1>, vector<8x8xf32>
    %24 = tpu.iota {dimensions = array<i32: 0>} : vector<8x8xi32>
    %c8_i32 = arith.constant 8 : i32
    %25 = arith.muli %arg1, %c8_i32 : i32
    %26 = vector.broadcast %25 : i32 to vector<8x8xi32>
    %27 = arith.addi %24, %26 : vector<8x8xi32>
    %28 = tpu.iota {dimensions = array<i32: 1>} : vector<8x8xi32>
    %29 = arith.subi %28, %27 : vector<8x8xi32>
    %c0_i32 = arith.constant 0 : i32
    %30 = vector.broadcast %c0_i32 : i32 to vector<8x8xi32>
    %31 = arith.cmpi sge, %29, %30 : vector<8x8xi32>
    %c-2_i32 = arith.constant -2 : i32
    %32 = vector.broadcast %c-2_i32 : i32 to vector<8x8xi32>
    %33 = arith.cmpi sge, %29, %32 : vector<8x8xi32>
    %c-3_i32 = arith.constant -3 : i32
    %34 = vector.broadcast %c-3_i32 : i32 to vector<8x8xi32>
    %35 = arith.cmpi sge, %29, %34 : vector<8x8xi32>
    %36 = vector.extract_strided_slice %11 {offsets = [0, 0], sizes = [8, 1], strides = [1, 1]} : vector<8x18xf32> to vector<8x1xf32>
    %37 = vector.extract_strided_slice %11 {offsets = [0, 9], sizes = [8, 1], strides = [1, 1]} : vector<8x18xf32> to vector<8x1xf32>
    %38 = vector.extract_strided_slice %11 {offsets = [0, 1], sizes = [8, 1], strides = [1, 1]} : vector<8x18xf32> to vector<8x1xf32>
    %39 = vector.extract_strided_slice %11 {offsets = [0, 10], sizes = [8, 1], strides = [1, 1]} : vector<8x18xf32> to vector<8x1xf32>
    %40 = vector.shape_cast %38 : vector<8x1xf32> to vector<8x1xf32>
    %41 = vector.broadcast %40 : vector<8x1xf32> to vector<8x8xf32>
    %42 = vector.shape_cast %36 : vector<8x1xf32> to vector<8x1xf32>
    %43 = vector.broadcast %42 : vector<8x1xf32> to vector<8x8xf32>
    %44 = arith.select %35, %41, %43 : vector<8x8xi1>, vector<8x8xf32>
    %45 = vector.shape_cast %39 : vector<8x1xf32> to vector<8x1xf32>
    %46 = vector.broadcast %45 : vector<8x1xf32> to vector<8x8xf32>
    %47 = vector.shape_cast %37 : vector<8x1xf32> to vector<8x1xf32>
    %48 = vector.broadcast %47 : vector<8x1xf32> to vector<8x8xf32>
    %49 = arith.select %35, %46, %48 : vector<8x8xi1>, vector<8x8xf32>
    %c-1_i32 = arith.constant -1 : i32
    %50 = vector.broadcast %c-1_i32 : i32 to vector<8x8xi32>
    %51 = arith.cmpi sge, %29, %50 : vector<8x8xi32>
    %52 = vector.extract_strided_slice %11 {offsets = [0, 2], sizes = [8, 1], strides = [1, 1]} : vector<8x18xf32> to vector<8x1xf32>
    %53 = vector.extract_strided_slice %11 {offsets = [0, 11], sizes = [8, 1], strides = [1, 1]} : vector<8x18xf32> to vector<8x1xf32>
    %54 = vector.extract_strided_slice %11 {offsets = [0, 3], sizes = [8, 1], strides = [1, 1]} : vector<8x18xf32> to vector<8x1xf32>
    %55 = vector.extract_strided_slice %11 {offsets = [0, 12], sizes = [8, 1], strides = [1, 1]} : vector<8x18xf32> to vector<8x1xf32>
    %56 = vector.shape_cast %54 : vector<8x1xf32> to vector<8x1xf32>
    %57 = vector.broadcast %56 : vector<8x1xf32> to vector<8x8xf32>
    %58 = vector.shape_cast %52 : vector<8x1xf32> to vector<8x1xf32>
    %59 = vector.broadcast %58 : vector<8x1xf32> to vector<8x8xf32>
    %60 = arith.select %51, %57, %59 : vector<8x8xi1>, vector<8x8xf32>
    %61 = vector.shape_cast %55 : vector<8x1xf32> to vector<8x1xf32>
    %62 = vector.broadcast %61 : vector<8x1xf32> to vector<8x8xf32>
    %63 = vector.shape_cast %53 : vector<8x1xf32> to vector<8x1xf32>
    %64 = vector.broadcast %63 : vector<8x1xf32> to vector<8x8xf32>
    %65 = arith.select %51, %62, %64 : vector<8x8xi1>, vector<8x8xf32>
    %66 = arith.select %33, %60, %44 : vector<8x8xi1>, vector<8x8xf32>
    %67 = arith.select %33, %65, %49 : vector<8x8xi1>, vector<8x8xf32>
    %c2_i32 = arith.constant 2 : i32
    %68 = vector.broadcast %c2_i32 : i32 to vector<8x8xi32>
    %69 = arith.cmpi sge, %29, %68 : vector<8x8xi32>
    %c1_i32 = arith.constant 1 : i32
    %70 = vector.broadcast %c1_i32 : i32 to vector<8x8xi32>
    %71 = arith.cmpi sge, %29, %70 : vector<8x8xi32>
    %72 = vector.extract_strided_slice %11 {offsets = [0, 4], sizes = [8, 1], strides = [1, 1]} : vector<8x18xf32> to vector<8x1xf32>
    %73 = vector.extract_strided_slice %11 {offsets = [0, 13], sizes = [8, 1], strides = [1, 1]} : vector<8x18xf32> to vector<8x1xf32>
    %74 = vector.extract_strided_slice %11 {offsets = [0, 5], sizes = [8, 1], strides = [1, 1]} : vector<8x18xf32> to vector<8x1xf32>
    %75 = vector.extract_strided_slice %11 {offsets = [0, 14], sizes = [8, 1], strides = [1, 1]} : vector<8x18xf32> to vector<8x1xf32>
    %76 = vector.shape_cast %74 : vector<8x1xf32> to vector<8x1xf32>
    %77 = vector.broadcast %76 : vector<8x1xf32> to vector<8x8xf32>
    %78 = vector.shape_cast %72 : vector<8x1xf32> to vector<8x1xf32>
    %79 = vector.broadcast %78 : vector<8x1xf32> to vector<8x8xf32>
    %80 = arith.select %71, %77, %79 : vector<8x8xi1>, vector<8x8xf32>
    %81 = vector.shape_cast %75 : vector<8x1xf32> to vector<8x1xf32>
    %82 = vector.broadcast %81 : vector<8x1xf32> to vector<8x8xf32>
    %83 = vector.shape_cast %73 : vector<8x1xf32> to vector<8x1xf32>
    %84 = vector.broadcast %83 : vector<8x1xf32> to vector<8x8xf32>
    %85 = arith.select %71, %82, %84 : vector<8x8xi1>, vector<8x8xf32>
    %c3_i32 = arith.constant 3 : i32
    %86 = vector.broadcast %c3_i32 : i32 to vector<8x8xi32>
    %87 = arith.cmpi sge, %29, %86 : vector<8x8xi32>
    %88 = vector.extract_strided_slice %11 {offsets = [0, 6], sizes = [8, 1], strides = [1, 1]} : vector<8x18xf32> to vector<8x1xf32>
    %89 = vector.extract_strided_slice %11 {offsets = [0, 15], sizes = [8, 1], strides = [1, 1]} : vector<8x18xf32> to vector<8x1xf32>
    %c4_i32 = arith.constant 4 : i32
    %90 = vector.broadcast %c4_i32 : i32 to vector<8x8xi32>
    %91 = arith.cmpi sge, %29, %90 : vector<8x8xi32>
    %92 = vector.extract_strided_slice %11 {offsets = [0, 7], sizes = [8, 1], strides = [1, 1]} : vector<8x18xf32> to vector<8x1xf32>
    %93 = vector.extract_strided_slice %11 {offsets = [0, 16], sizes = [8, 1], strides = [1, 1]} : vector<8x18xf32> to vector<8x1xf32>
    %94 = vector.extract_strided_slice %11 {offsets = [0, 8], sizes = [8, 1], strides = [1, 1]} : vector<8x18xf32> to vector<8x1xf32>
    %95 = vector.extract_strided_slice %11 {offsets = [0, 17], sizes = [8, 1], strides = [1, 1]} : vector<8x18xf32> to vector<8x1xf32>
    %96 = vector.shape_cast %94 : vector<8x1xf32> to vector<8x1xf32>
    %97 = vector.broadcast %96 : vector<8x1xf32> to vector<8x8xf32>
    %98 = vector.shape_cast %92 : vector<8x1xf32> to vector<8x1xf32>
    %99 = vector.broadcast %98 : vector<8x1xf32> to vector<8x8xf32>
    %100 = arith.select %91, %97, %99 : vector<8x8xi1>, vector<8x8xf32>
    %101 = vector.shape_cast %95 : vector<8x1xf32> to vector<8x1xf32>
    %102 = vector.broadcast %101 : vector<8x1xf32> to vector<8x8xf32>
    %103 = vector.shape_cast %93 : vector<8x1xf32> to vector<8x1xf32>
    %104 = vector.broadcast %103 : vector<8x1xf32> to vector<8x8xf32>
    %105 = arith.select %91, %102, %104 : vector<8x8xi1>, vector<8x8xf32>
    %106 = vector.shape_cast %88 : vector<8x1xf32> to vector<8x1xf32>
    %107 = vector.broadcast %106 : vector<8x1xf32> to vector<8x8xf32>
    %108 = arith.select %87, %100, %107 : vector<8x8xi1>, vector<8x8xf32>
    %109 = vector.shape_cast %89 : vector<8x1xf32> to vector<8x1xf32>
    %110 = vector.broadcast %109 : vector<8x1xf32> to vector<8x8xf32>
    %111 = arith.select %87, %105, %110 : vector<8x8xi1>, vector<8x8xf32>
    %112 = arith.select %69, %108, %80 : vector<8x8xi1>, vector<8x8xf32>
    %113 = arith.select %69, %111, %85 : vector<8x8xi1>, vector<8x8xf32>
    %114 = arith.select %31, %112, %66 : vector<8x8xi1>, vector<8x8xf32>
    %115 = arith.select %31, %113, %67 : vector<8x8xi1>, vector<8x8xf32>
    %116 = arith.addf %6, %114 : vector<8x8xf32>
    %117 = arith.addf %116, %23 : vector<8x8xf32>
    %118 = arith.addf %9, %115 : vector<8x8xf32>
    %119 = arith.addf %118, %23 : vector<8x8xf32>
    %cst_18 = arith.constant dense<0xFF800000> : vector<8xf32>
    %120 = vector.multi_reduction <maximumf>, %117, %cst_18 [1] : vector<8x8xf32> to vector<8xf32>
    %121 = vector.shape_cast %120 : vector<8xf32> to vector<8x1xf32>
    %122 = vector.broadcast %121 : vector<8x1xf32> to vector<8x8xf32>
    %123 = arith.subf %117, %122 : vector<8x8xf32>
    %124 = math.exp %123 : vector<8x8xf32>
    %cst_19 = arith.constant dense<0.000000e+00> : vector<8xf32>
    %125 = vector.multi_reduction <add>, %124, %cst_19 [1] : vector<8x8xf32> to vector<8xf32>
    %126 = vector.shape_cast %125 : vector<8xf32> to vector<8x1xf32>
    %127 = tpu.reciprocal %126 : vector<8x1xf32> -> vector<8x1xf32>
    %128 = vector.broadcast %127 : vector<8x1xf32> to vector<8x8xf32>
    %129 = arith.mulf %124, %128 : vector<8x8xf32>
    %c0_20 = arith.constant 0 : index
    %c0_21 = arith.constant 0 : index
    %c0_22 = arith.constant 0 : index
    %130 = vector.load %arg7[%c0_20, %c0_21, %c0_22] : memref<1x8x8xf32, #tpu.memory_space<vmem>>, vector<1x8x8xf32>
    %131 = vector.shape_cast %130 : vector<1x8x8xf32> to vector<8x8xf32>
    %132 = vector.shape_cast %129 : vector<8x8xf32> to vector<1x8x8xf32>
    tpu.vector_store %arg7[%c0_20, %c0_21, %c0_22], %132 {strides = array<i32>} : memref<1x8x8xf32, #tpu.memory_space<vmem>>, vector<1x8x8xf32>,
    %cst_23 = arith.constant dense<0xFF800000> : vector<8xf32>
    %133 = vector.multi_reduction <maximumf>, %119, %cst_23 [1] : vector<8x8xf32> to vector<8xf32>
    %134 = vector.shape_cast %133 : vector<8xf32> to vector<8x1xf32>
    %135 = vector.broadcast %134 : vector<8x1xf32> to vector<8x8xf32>
    %136 = arith.subf %119, %135 : vector<8x8xf32>
    %137 = math.exp %136 : vector<8x8xf32>
    %cst_24 = arith.constant dense<0.000000e+00> : vector<8xf32>
    %138 = vector.multi_reduction <add>, %137, %cst_24 [1] : vector<8x8xf32> to vector<8xf32>
    %139 = vector.shape_cast %138 : vector<8xf32> to vector<8x1xf32>
    %140 = tpu.reciprocal %139 : vector<8x1xf32> -> vector<8x1xf32>
    %141 = vector.broadcast %140 : vector<8x1xf32> to vector<8x8xf32>
    %142 = arith.mulf %137, %141 : vector<8x8xf32>
    %c0_25 = arith.constant 0 : index
    %c0_26 = arith.constant 0 : index
    %c0_27 = arith.constant 0 : index
    %143 = vector.load %arg8[%c0_25, %c0_26, %c0_27] : memref<1x8x8xf32, #tpu.memory_space<vmem>>, vector<1x8x8xf32>
    %144 = vector.shape_cast %143 : vector<1x8x8xf32> to vector<8x8xf32>
    %145 = vector.shape_cast %142 : vector<8x8xf32> to vector<1x8x8xf32>
    tpu.vector_store %arg8[%c0_25, %c0_26, %c0_27], %145 {strides = array<i32>} : memref<1x8x8xf32, #tpu.memory_space<vmem>>, vector<1x8x8xf32>,
    return
  }
  func.func @transform_0(%arg0: i32, %arg1: i32) -> (i32, i32, i32) {
    %c0_i32 = arith.constant 0 : i32
    %c0_i32_0 = arith.constant 0 : i32
    return %arg0, %arg1, %c0_i32 : i32, i32, i32
  }
  func.func @transform_1(%arg0: i32, %arg1: i32) -> (i32, i32, i32) {
    %c0_i32 = arith.constant 0 : i32
    %c0_i32_0 = arith.constant 0 : i32
    %c0_i32_1 = arith.constant 0 : i32
    return %arg0, %c0_i32, %c0_i32_0 : i32, i32, i32
  }
  func.func @transform_2(%arg0: i32, %arg1: i32) -> (i32, i32, i32) {
    %c0_i32 = arith.constant 0 : i32
    %c0_i32_0 = arith.constant 0 : i32
    return %arg0, %arg1, %c0_i32 : i32, i32, i32
  }
  func.func @transform_3(%arg0: i32, %arg1: i32) -> (i32, i32, i32) {
    %c0_i32 = arith.constant 0 : i32
    %c0_i32_0 = arith.constant 0 : i32
    %c0_i32_1 = arith.constant 0 : i32
    return %arg0, %c0_i32, %c0_i32_0 : i32, i32, i32
  }
  func.func @transform_4(%arg0: i32, %arg1: i32) -> (i32, i32) {
    %c0_i32 = arith.constant 0 : i32
    %c0_i32_0 = arith.constant 0 : i32
    %c0_i32_1 = arith.constant 0 : i32
    return %c0_i32, %c0_i32_0 : i32, i32
  }
  func.func @transform_5(%arg0: i32, %arg1: i32) -> (i32, i32, i32) {
    %c0_i32 = arith.constant 0 : i32
    %c0_i32_0 = arith.constant 0 : i32
    return %arg0, %arg1, %c0_i32 : i32, i32, i32
  }
  func.func @transform_6(%arg0: i32, %arg1: i32) -> (i32, i32, i32) {
    %c0_i32 = arith.constant 0 : i32
    %c0_i32_0 = arith.constant 0 : i32
    return %arg0, %arg1, %c0_i32 : i32, i32, i32
  }
}

</mosaic_0001>

<llo_original>
// kernel: span_classifier_forward.1
$region0: #{span_classifier_forward.1}
  #allocation0 [shape = 'u32[]', space=smem, size = 0x4, offset = 0x4, fixed_abs, tag = 'smem constant byte address 0x4 - core index']
  #allocation1 [shape = 'u32[144,128]{1,0:T(1,128)}', space=vmem, size = 0x12000, scoped, tag = 'internal scratch']
  %s0 = inlined_call_operand.vmem [shape: bf16[2,8,256], index: 0, kind: input, shape index: {}]
  %s1 = inlined_call_operand.vmem [shape: bf16[2,256,8], index: 1, kind: input, shape index: {}]
  %s2 = inlined_call_operand.vmem [shape: f32[2,8,1], index: 2, kind: input, shape index: {}]
  %s3 = inlined_call_operand.vmem [shape: f32[2,1,8], index: 3, kind: input, shape index: {}]
  %s4 = inlined_call_operand.vmem [shape: bf16[256,18], index: 4, kind: input, shape index: {}]
  %s5 = inlined_call_operand.hbm [shape: f32[2,8,8], index: 5, kind: output, shape index: {0}]
  %s6 = inlined_call_operand.hbm [shape: f32[2,8,8], index: 6, kind: output, shape index: {1}]
  %7 = xla_tuple %s5, %s6
  %s8 = sld [smem:[#allocation0]]
  $region61: #{span_classifier_forward.1} parent=0
    _
  %s10 = ssub.s32 1, %s8
  %s11 = scalar_select 0, %s10, %s8
  $region1: #{span_classifier_forward.1} parent=0
    #allocation2 [shape = 'u8[8192]{0}', space=vmem, size = 0x2000, scoped, tag = 'output window, operand 0']
    #allocation3 [shape = 's32[2]{0}', space=sflag, size = 0x8, scoped, tag = 'scoped memory for span_classifier_forward.1']
    #allocation4 [shape = 'u8[8192]{0}', space=vmem, size = 0x2000, scoped, tag = 'output window, operand 1']
    #allocation5 [shape = 's32[2]{0}', space=sflag, size = 0x8, scoped, tag = 'scoped memory for span_classifier_forward.1']
    %12 = vsyncpa [#allocation3], 0
    %s13 = scalar_lea.sflag [#allocation3], 1
    %14 = vsyncpa %s13, 0
    %15 = vsyncpa [#allocation5], 0
    %s16 = scalar_lea.sflag [#allocation5], 1
    %17 = vsyncpa %s16, 0
    loop: start=0, step=1, limit=4
    $region2: #{span_classifier_forward.1} parent=1 // loop_pre_header
      _
    $region3: #{span_classifier_forward.1} parent=1 // loop_header
      %s19 = sphi 0, %s23
      %p20 = scmp.ge.s32.totalorder %s19, 4
      %s26 = sphi 0, %s38
      %s27 = sphi 0, %s34
      %s28 = sphi 0, %s26
      %s29 = sphi 0, %s27
      %s30 = sphi 0, %s28
      %s31 = sphi 0, %s29
      %s43 = sphi 0, %s45
      %s46 = sphi 0, %s43
      %s47 = sphi 0, %s46
      %s63 = sphi 0, %s47
      %s69 = sphi 0, %s71
      %s72 = sphi 0, %s69
      %s73 = sphi 0, %s72
      %s89 = sphi 0, %s73
      %s97 = sphi 0, %s99
      %s100 = sphi 0, %s97
      %s101 = sphi 0, %s100
      %s117 = sphi 0, %s101
      %s123 = sphi 0, %s125
      %s126 = sphi 0, %s123
      %s127 = sphi 0, %s126
      %s143 = sphi 0, %s127
      %s147 = sphi 0, %s147
      %s149 = sphi 0, %s147
      %s150 = sphi 0, %s149
      %s164 = sphi 0, %s150
      %s172 = sphi 0, %s174
      %s175 = sphi 0, %s172
      %s176 = sphi 0, %s175
      %s192 = sphi 0, %s176
      %s200 = sphi 0, %s202
      %s203 = sphi 0, %s200
      %s204 = sphi 0, %s203
      %s220 = sphi 0, %s204
    $region4: #{span_classifier_forward.1} parent=1 // loop_header_branch
      %22 = sbr.rel (%p20) target = $region8
    $region5: #{span_classifier_forward.1} parent=1 // loop_body
      %s24 = ssub.s32 %s19, 1
      %s25 = ssub.s32 %s19, 2
      %s32 = sadd.s32 1, %s27
      %p33 = scmp.ge.s32.totalorder %s32, 1
      %s34 = scalar_select %p33, 0, %s32
      %s35 = sadd.s32 1, %s26
      %s36 = scalar_select %p33, %s35, %s26
      %p37 = scmp.ge.s32.totalorder %s36, 2
      %s38 = scalar_select %p37, 0, %s36
      %s39 = ssub.s32 %s26, %s38
      %s40 = ssub.s32 %s27, %s34
      %s41 = sor.u32 %s39, %s40
      %p42 = scmp.eq.s32.totalorder %s41, 0
      %s44 = sadd.s32 %s43, 1
      %s45 = scalar_select %p42, %s43, %s44
      %p48 = pneg %p42
      %p49 = scmp.eq.s32.totalorder %s19, 1
      %p50 = por %p48, %p49
      %p51 = scmp.ne.s32.totalorder %s43, %s46
      %p52 = scmp.eq.s32.totalorder %s19, 0
      %p53 = por %p51, %p52
      %p54 = scmp.ne.s32.totalorder %s43, %s46
      %p55 = scmp.eq.s32.totalorder %s24, 1
      %p56 = por %p54, %p55
      %p57 = scmp.ne.s32.totalorder %s46, %s47
      %p58 = scmp.eq.s32.totalorder %s24, 0
      %p59 = por %p57, %p58
      %p60 = scmp.ne.s32.totalorder %s46, %s47
      %p61 = scmp.eq.s32.totalorder %s25, 1
      %p62 = por %p60, %p61
      %p64 = scmp.ne.s32.totalorder %s47, %s63
      %p65 = scmp.eq.s32.totalorder %s25, 0
      %p66 = por %p64, %p65
      %s67 = ssub.s32 %s26, %s38
      %p68 = scmp.eq.s32.totalorder %s67, 0
      %s70 = sadd.s32 %s69, 1
      %s71 = scalar_select %p68, %s69, %s70
      %p74 = pneg %p68
      %p75 = scmp.eq.s32.totalorder %s19, 1
      %p76 = por %p74, %p75
      %p77 = scmp.ne.s32.totalorder %s69, %s72
      %p78 = scmp.eq.s32.totalorder %s19, 0
      %p79 = por %p77, %p78
      %p80 = scmp.ne.s32.totalorder %s69, %s72
      %p81 = scmp.eq.s32.totalorder %s24, 1
      %p82 = por %p80, %p81
      %p83 = scmp.ne.s32.totalorder %s72, %s73
      %p84 = scmp.eq.s32.totalorder %s24, 0
      %p85 = por %p83, %p84
      %p86 = scmp.ne.s32.totalorder %s72, %s73
      %p87 = scmp.eq.s32.totalorder %s25, 1
      %p88 = por %p86, %p87
      %p90 = scmp.ne.s32.totalorder %s73, %s89
      %p91 = scmp.eq.s32.totalorder %s25, 0
      %p92 = por %p90, %p91
      %s93 = ssub.s32 %s26, %s38
      %s94 = ssub.s32 %s27, %s34
      %s95 = sor.u32 %s93, %s94
      %p96 = scmp.eq.s32.totalorder %s95, 0
      %s98 = sadd.s32 %s97, 1
      %s99 = scalar_select %p96, %s97, %s98
      %p102 = pneg %p96
      %p103 = scmp.eq.s32.totalorder %s19, 1
      %p104 = por %p102, %p103
      %p105 = scmp.ne.s32.totalorder %s97, %s100
      %p106 = scmp.eq.s32.totalorder %s19, 0
      %p107 = por %p105, %p106
      %p108 = scmp.ne.s32.totalorder %s97, %s100
      %p109 = scmp.eq.s32.totalorder %s24, 1
      %p110 = por %p108, %p109
      %p111 = scmp.ne.s32.totalorder %s100, %s101
      %p112 = scmp.eq.s32.totalorder %s24, 0
      %p113 = por %p111, %p112
      %p114 = scmp.ne.s32.totalorder %s100, %s101
      %p115 = scmp.eq.s32.totalorder %s25, 1
      %p116 = por %p114, %p115
      %p118 = scmp.ne.s32.totalorder %s101, %s117
      %p119 = scmp.eq.s32.totalorder %s25, 0
      %p120 = por %p118, %p119
      %s121 = ssub.s32 %s26, %s38
      %p122 = scmp.eq.s32.totalorder %s121, 0
      %s124 = sadd.s32 %s123, 1
      %s125 = scalar_select %p122, %s123, %s124
      %p128 = pneg %p122
      %p129 = scmp.eq.s32.totalorder %s19, 1
      %p130 = por %p128, %p129
      %p131 = scmp.ne.s32.totalorder %s123, %s126
      %p132 = scmp.eq.s32.totalorder %s19, 0
      %p133 = por %p131, %p132
      %p134 = scmp.ne.s32.totalorder %s123, %s126
      %p135 = scmp.eq.s32.totalorder %s24, 1
      %p136 = por %p134, %p135
      %p137 = scmp.ne.s32.totalorder %s126, %s127
      %p138 = scmp.eq.s32.totalorder %s24, 0
      %p139 = por %p137, %p138
      %p140 = scmp.ne.s32.totalorder %s126, %s127
      %p141 = scmp.eq.s32.totalorder %s25, 1
      %p142 = por %p140, %p141
      %p144 = scmp.ne.s32.totalorder %s127, %s143
      %p145 = scmp.eq.s32.totalorder %s25, 0
      %p146 = por %p144, %p145
      %s148 = sadd.s32 %s147, 1
      %p151 = scmp.eq.s32.totalorder %s19, 1
      %p152 = scmp.ne.s32.totalorder %s147, %s149
      %p153 = scmp.eq.s32.totalorder %s19, 0
      %p154 = por %p152, %p153
      %p155 = scmp.ne.s32.totalorder %s147, %s149
      %p156 = scmp.eq.s32.totalorder %s24, 1
      %p157 = por %p155, %p156
      %p158 = scmp.ne.s32.totalorder %s149, %s150
      %p159 = scmp.eq.s32.totalorder %s24, 0
      %p160 = por %p158, %p159
      %p161 = scmp.ne.s32.totalorder %s149, %s150
      %p162 = scmp.eq.s32.totalorder %s25, 1
      %p163 = por %p161, %p162
      %p165 = scmp.ne.s32.totalorder %s150, %s164
      %p166 = scmp.eq.s32.totalorder %s25, 0
      %p167 = por %p165, %p166
      %s168 = ssub.s32 %s26, %s38
      %s169 = ssub.s32 %s27, %s34
      %s170 = sor.u32 %s168, %s169
      %p171 = scmp.eq.s32.totalorder %s170, 0
      %s173 = sadd.s32 %s172, 1
      %s174 = scalar_select %p171, %s172, %s173
      %p177 = pneg %p171
      %p178 = scmp.eq.s32.totalorder %s19, 1
      %p179 = por %p177, %p178
      %p180 = scmp.ne.s32.totalorder %s172, %s175
      %p181 = scmp.eq.s32.totalorder %s19, 0
      %p182 = por %p180, %p181
      %p183 = scmp.ne.s32.totalorder %s172, %s175
      %p184 = scmp.eq.s32.totalorder %s24, 1
      %p185 = por %p183, %p184
      %p186 = scmp.ne.s32.totalorder %s175, %s176
      %p187 = scmp.eq.s32.totalorder %s24, 0
      %p188 = por %p186, %p187
      %p189 = scmp.ne.s32.totalorder %s175, %s176
      %p190 = scmp.eq.s32.totalorder %s25, 1
      %p191 = por %p189, %p190
      %p193 = scmp.ne.s32.totalorder %s176, %s192
      %p194 = scmp.eq.s32.totalorder %s25, 0
      %p195 = por %p193, %p194
      %s196 = ssub.s32 %s26, %s38
      %s197 = ssub.s32 %s27, %s34
      %s198 = sor.u32 %s196, %s197
      %p199 = scmp.eq.s32.totalorder %s198, 0
      %s201 = sadd.s32 %s200, 1
      %s202 = scalar_select %p199, %s200, %s201
      %p205 = pneg %p199
      %p206 = scmp.eq.s32.totalorder %s19, 1
      %p207 = por %p205, %p206
      %p208 = scmp.ne.s32.totalorder %s200, %s203
      %p209 = scmp.eq.s32.totalorder %s19, 0
      %p210 = por %p208, %p209
      %p211 = scmp.ne.s32.totalorder %s200, %s203
      %p212 = scmp.eq.s32.totalorder %s24, 1
      %p213 = por %p211, %p212
      %p214 = scmp.ne.s32.totalorder %s203, %s204
      %p215 = scmp.eq.s32.totalorder %s24, 0
      %p216 = por %p214, %p215
      %p217 = scmp.ne.s32.totalorder %s203, %s204
      %p218 = scmp.eq.s32.totalorder %s25, 1
      %p219 = por %p217, %p218
      %p221 = scmp.ne.s32.totalorder %s204, %s220
      %p222 = scmp.eq.s32.totalorder %s25, 0
      %p223 = por %p221, %p222
      %p224 = scmp.le.s32.totalorder 1, %s19
      %p225 = scmp.lt.s32.totalorder %s19, 3
      %p226 = pnand %p224, %p225
      %p227 = pneg %p226
      // Predicated region
      $region9: #{span_classifier_forward.1} parent=5 // pred_check
        _
      $region10: #{span_classifier_forward.1} parent=5 // pred_check_branch
        %229 = sbr.rel (%p226) target = $region12
      $region11: #{span_classifier_forward.1} parent=5 // pred_region
        %s230 = ssub.s32 %s19, 1
        // Predicated region
        $region13: #{span_classifier_forward.1} parent=11 // pred_check
          %p231 = pneg %p160
        $region14: #{span_classifier_forward.1} parent=11 // pred_check_branch
          %233 = sbr.rel (%p231) target = $region16
        $region15: #{span_classifier_forward.1} parent=11 // pred_region
          _
        $region16: #{span_classifier_forward.1} parent=11 // pred_fallthru
          _
      $region12: #{span_classifier_forward.1} parent=5 // pred_fallthru
        _
      %p234 = scmp.lt.s32.totalorder %s19, 2
      // Predicated region
      $region17: #{span_classifier_forward.1} parent=5 // pred_check
        %p235 = pneg %p234
      $region18: #{span_classifier_forward.1} parent=5 // pred_check_branch
        %237 = sbr.rel (%p235) target = $region20
      $region19: #{span_classifier_forward.1} parent=5 // pred_region
        // Predicated region
        $region21: #{span_classifier_forward.1} parent=19 // pred_check
          %p238 = pneg %p53
        $region22: #{span_classifier_forward.1} parent=19 // pred_check_branch
          %240 = sbr.rel (%p238) target = $region24
        $region23: #{span_classifier_forward.1} parent=19 // pred_region
          %p241 = scmp.lt.s32.totalorder %s26, 1
          %s242 = scalar_select %p241, %s26, 1
          %p243 = scmp.lt.s32.totalorder %s27, 0
          %s244 = scalar_select %p243, %s27, 0
          %s245 = smul.addr %s244, 2
          %s246 = smul.addr %s242, 2
          %s247 = sadd.s32 %s245, %s246
          %s248 = smul.addr %s247, 4
          %s249 = scalar_lea.vmem %s0, %s248
        $region24: #{span_classifier_forward.1} parent=19 // pred_fallthru
          _
        // Predicated region
        $region25: #{span_classifier_forward.1} parent=19 // pred_check
          %p250 = pneg %p79
        $region26: #{span_classifier_forward.1} parent=19 // pred_check_branch
          %252 = sbr.rel (%p250) target = $region28
        $region27: #{span_classifier_forward.1} parent=19 // pred_region
          %p253 = scmp.lt.s32.totalorder %s26, 1
          %s254 = scalar_select %p253, %s26, 1
          %s255 = smul.addr %s254, 32
          %s256 = smul.addr %s255, 4
          %s257 = scalar_lea.vmem %s1, %s256
        $region28: #{span_classifier_forward.1} parent=19 // pred_fallthru
          _
        // Predicated region
        $region29: #{span_classifier_forward.1} parent=19 // pred_check
          %p258 = pneg %p107
        $region30: #{span_classifier_forward.1} parent=19 // pred_check_branch
          %260 = sbr.rel (%p258) target = $region32
        $region31: #{span_classifier_forward.1} parent=19 // pred_region
          %p261 = scmp.lt.s32.totalorder %s26, 1
          %s262 = scalar_select %p261, %s26, 1
          %p263 = scmp.lt.s32.totalorder %s27, 0
          %s264 = scalar_select %p263, %s27, 0
          %s265 = sadd.s32 %s264, %s262
          %s266 = smul.addr %s265, 8
          %s267 = scalar_lea.vmem %s2, %s266
        $region32: #{span_classifier_forward.1} parent=19 // pred_fallthru
          _
        // Predicated region
        $region33: #{span_classifier_forward.1} parent=19 // pred_check
          %p268 = pneg %p133
        $region34: #{span_classifier_forward.1} parent=19 // pred_check_branch
          %270 = sbr.rel (%p268) target = $region36
        $region35: #{span_classifier_forward.1} parent=19 // pred_region
          %p271 = scmp.lt.s32.totalorder %s26, 1
          %s272 = scalar_select %p271, %s26, 1
          %s273 = scalar_lea.vmem %s3, %s272
        $region36: #{span_classifier_forward.1} parent=19 // pred_fallthru
          _
      $region20: #{span_classifier_forward.1} parent=5 // pred_fallthru
        _
      %p274 = scmp.le.s32.totalorder 1, %s19
      %p275 = scmp.lt.s32.totalorder %s19, 3
      %p276 = pnand %p274, %p275
      %p277 = pneg %p276
      // Predicated region
      $region37: #{span_classifier_forward.1} parent=5 // pred_check
        _
      $region38: #{span_classifier_forward.1} parent=5 // pred_check_branch
        %279 = sbr.rel (%p276) target = $region40
      $region39: #{span_classifier_forward.1} parent=5 // pred_region
        %s280 = ssub.s32 %s19, 1
        %p281 = scmp.lt.s32.totalorder %s28, 1
        %s282 = scalar_select %p281, %s28, 1
        %p283 = scmp.lt.s32.totalorder %s29, 0
        %s284 = scalar_select %p283, %s29, 0
        %s285 = smul.addr %s284, 2
        %s286 = smul.addr %s282, 2
        %s287 = sadd.s32 %s285, %s286
        %s288 = smul.addr %s287, 4
        %s289 = scalar_lea.vmem %s0, %s288
        %p290 = pneg %p59
        %p291 = pneg %p56
        %p292 = scmp.lt.s32.totalorder %s28, 1
        %s293 = scalar_select %p292, %s28, 1
        %s294 = smul.addr %s293, 32
        %s295 = smul.addr %s294, 4
        %s296 = scalar_lea.vmem %s1, %s295
        %p297 = pneg %p85
        %p298 = pneg %p82
        %p299 = scmp.lt.s32.totalorder %s28, 1
        %s300 = scalar_select %p299, %s28, 1
        %p301 = scmp.lt.s32.totalorder %s29, 0
        %s302 = scalar_select %p301, %s29, 0
        %s303 = sadd.s32 %s302, %s300
        %s304 = smul.addr %s303, 8
        %s305 = scalar_lea.vmem %s2, %s304
        %p306 = pneg %p113
        %p307 = pneg %p110
        %p308 = scmp.lt.s32.totalorder %s28, 1
        %s309 = scalar_select %p308, %s28, 1
        %s310 = scalar_lea.vmem %s3, %s309
        %p311 = pneg %p139
        %p312 = pneg %p136
        %p313 = pneg %p160
        %p314 = pneg %p157
        %p315 = pneg %p188
        %p316 = pneg %p185
        %s317 = sand.u32 %s175, 1
        %s318 = scalar_lea.sflag [#allocation3], %s317
        %s319 = sand.u32 %s175, 1
        %s320 = smul.addr %s319, 8
        %s321 = scalar_lea.vmem [#allocation2], %s320
        %p322 = pneg %p216
        %p323 = pneg %p213
        %s324 = sand.u32 %s203, 1
        %s325 = scalar_lea.sflag [#allocation5], %s324
        %s326 = sand.u32 %s203, 1
        %s327 = smul.addr %s326, 8
        %s328 = scalar_lea.vmem [#allocation4], %s327
        %p329 = scmp.lt.s32.totalorder %s28, 1
        %s330 = scalar_select %p329, %s28, 1
        %p331 = scmp.lt.s32.totalorder %s29, 0
        %s332 = scalar_select %p331, %s29, 0
        %s333 = smul.addr %s332, 2
        %s334 = smul.addr %s330, 2
        %s335 = sadd.s32 %s333, %s334
        %s336 = smul.addr %s335, 4
        %s337 = scalar_lea.vmem %s0, %s336
        %p338 = scmp.lt.s32.totalorder %s28, 1
        %s339 = scalar_select %p338, %s28, 1
        %s340 = smul.addr %s339, 32
        %s341 = smul.addr %s340, 4
        %s342 = scalar_lea.vmem %s1, %s341
        %p343 = scmp.lt.s32.totalorder %s28, 1
        %s344 = scalar_select %p343, %s28, 1
        %p345 = scmp.lt.s32.totalorder %s29, 0
        %s346 = scalar_select %p345, %s29, 0
        %s347 = sadd.s32 %s346, %s344
        %s348 = smul.addr %s347, 8
        %s349 = scalar_lea.vmem %s2, %s348
        %p350 = scmp.lt.s32.totalorder %s28, 1
        %s351 = scalar_select %p350, %s28, 1
        %s352 = scalar_lea.vmem %s3, %s351
        %v354 = vld [vmem:[%s337] sm:$0xff]
        %v355 = vld [vmem:[%s342] sm:$0xf]
        %v356 = vld [vmem:[%s342 + $0x4] sm:$0xf]
        %v357 = vld [vmem:[%s342 + $0x8] sm:$0xf]
        %v358 = vld [vmem:[%s342 + $0xc] sm:$0xf]
        %v359 = vld [vmem:[%s342 + $0x10] sm:$0xf]
        %v360 = vld [vmem:[%s342 + $0x14] sm:$0xf]
        %v361 = vld [vmem:[%s342 + $0x18] sm:$0xf]
        %v362 = vld [vmem:[%s342 + $0x1c] sm:$0xf]
        %v363 = vld [vmem:[%s342 + $0x20] sm:$0xf]
        %v364 = vld [vmem:[%s342 + $0x24] sm:$0xf]
        %v365 = vld [vmem:[%s342 + $0x28] sm:$0xf]
        %v366 = vld [vmem:[%s342 + $0x2c] sm:$0xf]
        %v367 = vld [vmem:[%s342 + $0x30] sm:$0xf]
        %v368 = vld [vmem:[%s342 + $0x34] sm:$0xf]
        %v369 = vld [vmem:[%s342 + $0x38] sm:$0xf]
        %v370 = vld [vmem:[%s342 + $0x3c] sm:$0xf]
        %v371 = vld [vmem:[%s342 + $0x40] sm:$0xf]
        %v372 = vld [vmem:[%s342 + $0x44] sm:$0xf]
        %v373 = vld [vmem:[%s342 + $0x48] sm:$0xf]
        %v374 = vld [vmem:[%s342 + $0x4c] sm:$0xf]
        %v375 = vld [vmem:[%s342 + $0x50] sm:$0xf]
        %v376 = vld [vmem:[%s342 + $0x54] sm:$0xf]
        %v377 = vld [vmem:[%s342 + $0x58] sm:$0xf]
        %v378 = vld [vmem:[%s342 + $0x5c] sm:$0xf]
        %v379 = vld [vmem:[%s342 + $0x60] sm:$0xf]
        %v380 = vld [vmem:[%s342 + $0x64] sm:$0xf]
        %v381 = vld [vmem:[%s342 + $0x68] sm:$0xf]
        %v382 = vld [vmem:[%s342 + $0x6c] sm:$0xf]
        %v383 = vld [vmem:[%s342 + $0x70] sm:$0xf]
        %v384 = vld [vmem:[%s342 + $0x74] sm:$0xf]
        %v385 = vld [vmem:[%s342 + $0x78] sm:$0xf]
        %v386 = vld [vmem:[%s342 + $0x7c] sm:$0xf]
        %v387 = vld [vmem:[%s4] sm:$0xf]
        %v388 = vld [vmem:[%s4 + $0x4] sm:$0xf]
        %v389 = vld [vmem:[%s4 + $0x8] sm:$0xf]
        %v390 = vld [vmem:[%s4 + $0xc] sm:$0xf]
        %v391 = vld [vmem:[%s4 + $0x10] sm:$0xf]
        %v392 = vld [vmem:[%s4 + $0x14] sm:$0xf]
        %v393 = vld [vmem:[%s4 + $0x18] sm:$0xf]
        %v394 = vld [vmem:[%s4 + $0x1c] sm:$0xf]
        %v395 = vld [vmem:[%s4 + $0x20] sm:$0xf]
        %v396 = vld [vmem:[%s4 + $0x24] sm:$0xf]
        %v397 = vld [vmem:[%s4 + $0x28] sm:$0xf]
        %v398 = vld [vmem:[%s4 + $0x2c] sm:$0xf]
        %v399 = vld [vmem:[%s4 + $0x30] sm:$0xf]
        %v400 = vld [vmem:[%s4 + $0x34] sm:$0xf]
        %v401 = vld [vmem:[%s4 + $0x38] sm:$0xf]
        %v402 = vld [vmem:[%s4 + $0x3c] sm:$0xf]
        %v403 = vld [vmem:[%s4 + $0x40] sm:$0xf]
        %v404 = vld [vmem:[%s4 + $0x44] sm:$0xf]
        %v405 = vld [vmem:[%s4 + $0x48] sm:$0xf]
        %v406 = vld [vmem:[%s4 + $0x4c] sm:$0xf]
        %v407 = vld [vmem:[%s4 + $0x50] sm:$0xf]
        %v408 = vld [vmem:[%s4 + $0x54] sm:$0xf]
        %v409 = vld [vmem:[%s4 + $0x58] sm:$0xf]
        %v410 = vld [vmem:[%s4 + $0x5c] sm:$0xf]
        %v411 = vld [vmem:[%s4 + $0x60] sm:$0xf]
        %v412 = vld [vmem:[%s4 + $0x64] sm:$0xf]
        %v413 = vld [vmem:[%s4 + $0x68] sm:$0xf]
        %v414 = vld [vmem:[%s4 + $0x6c] sm:$0xf]
        %v415 = vld [vmem:[%s4 + $0x70] sm:$0xf]
        %v416 = vld [vmem:[%s4 + $0x74] sm:$0xf]
        %v417 = vld [vmem:[%s4 + $0x78] sm:$0xf]
        %v418 = vld [vmem:[%s4 + $0x7c] sm:$0xf]
        %v420 = vunpack.c.l.b16 %v354
        %v421 = vunpack.c.h.b16 %v354
        %v422 = vpack.c.b16 %v420, %v420
        %v423 = vpack.c.b16 %v421, %v421
        %v458 = vunpack.c.l.b16 %v387
        %v459 = vunpack.c.l.b16 %v388
        %v460 = vunpack.c.l.b16 %v389
        %v461 = vunpack.c.l.b16 %v390
        %v462 = vunpack.c.l.b16 %v391
        %v463 = vunpack.c.l.b16 %v392
        %v464 = vunpack.c.l.b16 %v393
        %v465 = vunpack.c.l.b16 %v394
        %v466 = vunpack.c.l.b16 %v395
        %v467 = vunpack.c.l.b16 %v396
        %v468 = vunpack.c.l.b16 %v397
        %v469 = vunpack.c.l.b16 %v398
        %v470 = vunpack.c.l.b16 %v399
        %v471 = vunpack.c.l.b16 %v400
        %v472 = vunpack.c.l.b16 %v401
        %v473 = vunpack.c.l.b16 %v402
        %v474 = vunpack.c.l.b16 %v403
        %v475 = vunpack.c.l.b16 %v404
        %v476 = vunpack.c.l.b16 %v405
        %v477 = vunpack.c.l.b16 %v406
        %v478 = vunpack.c.l.b16 %v407
        %v479 = vunpack.c.l.b16 %v408
        %v480 = vunpack.c.l.b16 %v409
        %v481 = vunpack.c.l.b16 %v410
        %v482 = vunpack.c.l.b16 %v411
        %v483 = vunpack.c.l.b16 %v412
        %v484 = vunpack.c.l.b16 %v413
        %v485 = vunpack.c.l.b16 %v414
        %v486 = vunpack.c.l.b16 %v415
        %v487 = vunpack.c.l.b16 %v416
        %v488 = vunpack.c.l.b16 %v417
        %v489 = vunpack.c.l.b16 %v418
        %v490 = vpack.c.b16 %v459, %v458
        %v491 = vpack.c.b16 %v461, %v460
        %v492 = vpack.c.b16 %v463, %v462
        %v493 = vpack.c.b16 %v465, %v464
        %v494 = vpack.c.b16 %v467, %v466
        %v495 = vpack.c.b16 %v469, %v468
        %v496 = vpack.c.b16 %v471, %v470
        %v497 = vpack.c.b16 %v473, %v472
        %v498 = vpack.c.b16 %v475, %v474
        %v499 = vpack.c.b16 %v477, %v476
        %v500 = vpack.c.b16 %v479, %v478
        %v501 = vpack.c.b16 %v481, %v480
        %v502 = vpack.c.b16 %v483, %v482
        %v503 = vpack.c.b16 %v485, %v484
        %v504 = vpack.c.b16 %v487, %v486
        %v505 = vpack.c.b16 %v489, %v488
        %522 = vmatprep.subr.bf16.mxu0 0
        %523 = vmatpush1.bf16.msra.mxu0 %v497
        %524 = vmatprep.subr.bf16.mxu0 0
        %525 = vmatpush1.bf16.msra.mxu0 %v496
        %526 = vmatprep.subr.bf16.mxu0 0
        %527 = vmatpush1.bf16.msra.mxu0 %v495
        %528 = vmatprep.subr.bf16.mxu0 0
        %529 = vmatpush1.bf16.msra.mxu0 %v494
        %530 = vmatprep.subr.bf16.mxu0 0
        %531 = vmatpush1.bf16.msra.mxu0 %v493
        %532 = vmatprep.subr.bf16.mxu0 0
        %533 = vmatpush1.bf16.msra.mxu0 %v492
        %534 = vmatprep.subr.bf16.mxu0 0
        %535 = vmatpush1.bf16.msra.mxu0 %v491
        %536 = vmatprep.subr.bf16.mxu0 0
        %537 = vmatpush1.bf16.msra.mxu0 %v490
        %538 = vmatprep.subr.bf16.mxu0 0
        %539 = vmatpush2.bf16.msra.mxu0 %v505
        %540 = vmatprep.subr.bf16.mxu0 0
        %541 = vmatpush2.bf16.msra.mxu0 %v504
        %542 = vmatprep.subr.bf16.mxu0 0
        %543 = vmatpush2.bf16.msra.mxu0 %v503
        %544 = vmatprep.subr.bf16.mxu0 0
        %545 = vmatpush2.bf16.msra.mxu0 %v502
        %546 = vmatprep.subr.bf16.mxu0 0
        %547 = vmatpush2.bf16.msra.mxu0 %v501
        %548 = vmatprep.subr.bf16.mxu0 0
        %549 = vmatpush2.bf16.msra.mxu0 %v500
        %550 = vmatprep.subr.bf16.mxu0 0
        %551 = vmatpush2.bf16.msra.mxu0 %v499
        %552 = vmatprep.subr.bf16.mxu0 0
        %553 = vmatpush2.bf16.msra.mxu0 %v498
        %554 = vmatprep.mubr.bf16.mxu0 %v423
        %555 = vmatmul.mubr.bf16.gmra.mxu0 %v422
        %v556 = vpop.f32.mrf.mxu0
        %v557 = vadd.f32 0.0, %v556
        %v558 = vpop.f32.mrf.mxu0
        %v559 = vpop.f32.mrf.mxu0
        %v560 = vpop.f32.mrf.mxu0
        %561 = vdwg.mxu0
        %v562 = vld [vmem:[%s349] sm:$0xff]
        %v563 = vld [vmem:[%s352] sm:$0x1]
        %565 = vset.pattern.permute.xlu0 0
        %566 = vperm.xlu0 %565, %v562
        %v567 = vpop.permute.xlu0 %566
        %v570 = vlaneseq
        %v571 = vshrl.u32 %v570, 7
        %v572 = vsub.s32 0, %v571
        %v573 = vrot.slane %v563, %v572
        %v575 = vmul.f32 %v567, %v573
        %vm576 = vcmp.eq.f32.partialorder %v575, 0.0
        %v577 = vsel %vm576, -1e+18, 0.0
        %v578 = vlaneseq
        %v579 = vshrl.u32 %v578, 7
        %s580 = smul.u32 %s29, 8
        %v581 = vstv %s580
        %v582 = vadd.s32 %v579, %v581
        %v583 = vlaneseq
        %v584 = vand.u32 %v583, 127
        %v585 = vsub.s32 %v584, %v582
        %vm586 = vcmp.ge.s32.totalorder %v585, 0
        %vm587 = vcmp.ge.s32.totalorder %v585, 4294967294
        %vm588 = vcmp.ge.s32.totalorder %v585, 4294967293
        %590 = vset.pattern.permute.xlu0 1
        %591 = vperm.xlu0 %590, %v557
        %v592 = vpop.permute.xlu0 %591
        %594 = vset.pattern.permute.xlu0 0
        %595 = vperm.xlu0 %594, %v557
        %v596 = vpop.permute.xlu0 %595
        %v598 = vsel %vm588, %v592, %v596
        %599 = vset.pattern.permute.xlu0 10
        %600 = vperm.xlu0 %599, %v557
        %v601 = vpop.permute.xlu0 %600
        %603 = vset.pattern.permute.xlu0 9
        %604 = vperm.xlu0 %603, %v557
        %v605 = vpop.permute.xlu0 %604
        %v607 = vsel %vm588, %v601, %v605
        %vm608 = vcmp.ge.s32.totalorder %v585, 4294967295
        %609 = vset.pattern.permute.xlu0 3
        %610 = vperm.xlu0 %609, %v557
        %v611 = vpop.permute.xlu0 %610
        %613 = vset.pattern.permute.xlu0 2
        %614 = vperm.xlu0 %613, %v557
        %v615 = vpop.permute.xlu0 %614
        %v617 = vsel %vm608, %v611, %v615
        %618 = vset.pattern.permute.xlu0 12
        %619 = vperm.xlu0 %618, %v557
        %v620 = vpop.permute.xlu0 %619
        %622 = vset.pattern.permute.xlu0 11
        %623 = vperm.xlu0 %622, %v557
        %v624 = vpop.permute.xlu0 %623
        %v626 = vsel %vm608, %v620, %v624
        %v627 = vsel %vm587, %v617, %v598
        %v628 = vsel %vm587, %v626, %v607
        %vm629 = vcmp.ge.s32.totalorder %v585, 2
        %vm630 = vcmp.ge.s32.totalorder %v585, 1
        %631 = vset.pattern.permute.xlu0 5
        %632 = vperm.xlu0 %631, %v557
        %v633 = vpop.permute.xlu0 %632
        %635 = vset.pattern.permute.xlu0 4
        %636 = vperm.xlu0 %635, %v557
        %v637 = vpop.permute.xlu0 %636
        %v639 = vsel %vm630, %v633, %v637
        %640 = vset.pattern.permute.xlu0 14
        %641 = vperm.xlu0 %640, %v557
        %v642 = vpop.permute.xlu0 %641
        %644 = vset.pattern.permute.xlu0 13
        %645 = vperm.xlu0 %644, %v557
        %v646 = vpop.permute.xlu0 %645
        %v648 = vsel %vm630, %v642, %v646
        %vm649 = vcmp.ge.s32.totalorder %v585, 3
        %vm650 = vcmp.ge.s32.totalorder %v585, 4
        %651 = vset.pattern.permute.xlu0 8
        %652 = vperm.xlu0 %651, %v557
        %v653 = vpop.permute.xlu0 %652
        %655 = vset.pattern.permute.xlu0 7
        %656 = vperm.xlu0 %655, %v557
        %v657 = vpop.permute.xlu0 %656
        %v659 = vsel %vm650, %v653, %v657
        %660 = vset.pattern.permute.xlu0 17
        %661 = vperm.xlu0 %660, %v557
        %v662 = vpop.permute.xlu0 %661
        %664 = vset.pattern.permute.xlu0 16
        %665 = vperm.xlu0 %664, %v557
        %v666 = vpop.permute.xlu0 %665
        %v668 = vsel %vm650, %v662, %v666
        %669 = vset.pattern.permute.xlu0 6
        %670 = vperm.xlu0 %669, %v557
        %v671 = vpop.permute.xlu0 %670
        %v673 = vsel %vm649, %v659, %v671
        %674 = vset.pattern.permute.xlu0 15
        %675 = vperm.xlu0 %674, %v557
        %v676 = vpop.permute.xlu0 %675
        %v678 = vsel %vm649, %v668, %v676
        %v679 = vsel %vm629, %v673, %v639
        %v680 = vsel %vm629, %v678, %v648
        %v681 = vsel %vm586, %v679, %v627
        %v682 = vsel %vm586, %v680, %v628
        %v699 = vunpack.c.l.b16 %v355
        %v700 = vunpack.c.l.b16 %v356
        %v701 = vunpack.c.l.b16 %v357
        %v702 = vunpack.c.l.b16 %v358
        %v703 = vunpack.c.l.b16 %v359
        %v704 = vunpack.c.l.b16 %v360
        %v705 = vunpack.c.l.b16 %v361
        %v706 = vunpack.c.l.b16 %v362
        %v707 = vunpack.c.l.b16 %v363
        %v708 = vunpack.c.l.b16 %v364
        %v709 = vunpack.c.l.b16 %v365
        %v710 = vunpack.c.l.b16 %v366
        %v711 = vunpack.c.l.b16 %v367
        %v712 = vunpack.c.l.b16 %v368
        %v713 = vunpack.c.l.b16 %v369
        %v714 = vunpack.c.l.b16 %v370
        %v715 = vpack.c.b16 %v700, %v699
        %v716 = vpack.c.b16 %v702, %v701
        %v717 = vpack.c.b16 %v704, %v703
        %v718 = vpack.c.b16 %v706, %v705
        %v719 = vpack.c.b16 %v708, %v707
        %v720 = vpack.c.b16 %v710, %v709
        %v721 = vpack.c.b16 %v712, %v711
        %v722 = vpack.c.b16 %v714, %v713
        %731 = vmatprep.subr.bf16.mxu0 0
        %732 = vmatpush1.bf16.msra.mxu0 %v722
        %733 = vmatprep.subr.bf16.mxu0 0
        %734 = vmatpush1.bf16.msra.mxu0 %v721
        %735 = vmatprep.subr.bf16.mxu0 0
        %736 = vmatpush1.bf16.msra.mxu0 %v720
        %737 = vmatprep.subr.bf16.mxu0 0
        %738 = vmatpush1.bf16.msra.mxu0 %v719
        %739 = vmatprep.subr.bf16.mxu0 0
        %740 = vmatpush1.bf16.msra.mxu0 %v718
        %741 = vmatprep.subr.bf16.mxu0 0
        %742 = vmatpush1.bf16.msra.mxu0 %v717
        %743 = vmatprep.subr.bf16.mxu0 0
        %744 = vmatpush1.bf16.msra.mxu0 %v716
        %745 = vmatprep.subr.bf16.mxu0 0
        %746 = vmatpush1.bf16.msra.mxu0 %v715
        %747 = vmatprep.subr.bf16.mxu0 0
        %748 = vmatpush2.bf16.msra.mxu0 0
        %749 = vmatprep.subr.bf16.mxu0 0
        %750 = vmatpush2.bf16.msra.mxu0 0
        %751 = vmatprep.subr.bf16.mxu0 0
        %752 = vmatpush2.bf16.msra.mxu0 0
        %753 = vmatprep.subr.bf16.mxu0 0
        %754 = vmatpush2.bf16.msra.mxu0 0
        %755 = vmatprep.subr.bf16.mxu0 0
        %756 = vmatpush2.bf16.msra.mxu0 0
        %757 = vmatprep.subr.bf16.mxu0 0
        %758 = vmatpush2.bf16.msra.mxu0 0
        %759 = vmatprep.subr.bf16.mxu0 0
        %760 = vmatpush2.bf16.msra.mxu0 0
        %761 = vmatprep.subr.bf16.mxu0 0
        %762 = vmatpush2.bf16.msra.mxu0 0
        %763 = vmatprep.mubr.bf16.mxu0 0
        %764 = vmatmul.mubr.bf16.gmra.mxu0 %v354
        %v765 = vpop.f32.mrf.mxu0
        %v766 = vadd.f32 %v681, %v765
        %v767 = vpop.f32.mrf.mxu0
        %v768 = vpop.f32.mrf.mxu0
        %v769 = vpop.f32.mrf.mxu0
        %770 = vdwg.mxu0
        %v771 = vadd.f32 %v766, %v577
        %v788 = vunpack.c.l.b16 %v371
        %v789 = vunpack.c.l.b16 %v372
        %v790 = vunpack.c.l.b16 %v373
        %v791 = vunpack.c.l.b16 %v374
        %v792 = vunpack.c.l.b16 %v375
        %v793 = vunpack.c.l.b16 %v376
        %v794 = vunpack.c.l.b16 %v377
        %v795 = vunpack.c.l.b16 %v378
        %v796 = vunpack.c.l.b16 %v379
        %v797 = vunpack.c.l.b16 %v380
        %v798 = vunpack.c.l.b16 %v381
        %v799 = vunpack.c.l.b16 %v382
        %v800 = vunpack.c.l.b16 %v383
        %v801 = vunpack.c.l.b16 %v384
        %v802 = vunpack.c.l.b16 %v385
        %v803 = vunpack.c.l.b16 %v386
        %v804 = vpack.c.b16 %v789, %v788
        %v805 = vpack.c.b16 %v791, %v790
        %v806 = vpack.c.b16 %v793, %v792
        %v807 = vpack.c.b16 %v795, %v794
        %v808 = vpack.c.b16 %v797, %v796
        %v809 = vpack.c.b16 %v799, %v798
        %v810 = vpack.c.b16 %v801, %v800
        %v811 = vpack.c.b16 %v803, %v802
        %820 = vmatprep.subr.bf16.mxu0 0
        %821 = vmatpush1.bf16.msra.mxu0 %v811
        %822 = vmatprep.subr.bf16.mxu0 0
        %823 = vmatpush1.bf16.msra.mxu0 %v810
        %824 = vmatprep.subr.bf16.mxu0 0
        %825 = vmatpush1.bf16.msra.mxu0 %v809
        %826 = vmatprep.subr.bf16.mxu0 0
        %827 = vmatpush1.bf16.msra.mxu0 %v808
        %828 = vmatprep.subr.bf16.mxu0 0
        %829 = vmatpush1.bf16.msra.mxu0 %v807
        %830 = vmatprep.subr.bf16.mxu0 0
        %831 = vmatpush1.bf16.msra.mxu0 %v806
        %832 = vmatprep.subr.bf16.mxu0 0
        %833 = vmatpush1.bf16.msra.mxu0 %v805
        %834 = vmatprep.subr.bf16.mxu0 0
        %835 = vmatpush1.bf16.msra.mxu0 %v804
        %836 = vmatprep.subr.bf16.mxu0 0
        %837 = vmatpush2.bf16.msra.mxu0 0
        %838 = vmatprep.subr.bf16.mxu0 0
        %839 = vmatpush2.bf16.msra.mxu0 0
        %840 = vmatprep.subr.bf16.mxu0 0
        %841 = vmatpush2.bf16.msra.mxu0 0
        %842 = vmatprep.subr.bf16.mxu0 0
        %843 = vmatpush2.bf16.msra.mxu0 0
        %844 = vmatprep.subr.bf16.mxu0 0
        %845 = vmatpush2.bf16.msra.mxu0 0
        %846 = vmatprep.subr.bf16.mxu0 0
        %847 = vmatpush2.bf16.msra.mxu0 0
        %848 = vmatprep.subr.bf16.mxu0 0
        %849 = vmatpush2.bf16.msra.mxu0 0
        %850 = vmatprep.subr.bf16.mxu0 0
        %851 = vmatpush2.bf16.msra.mxu0 0
        %852 = vmatprep.mubr.bf16.mxu0 0
        %853 = vmatmul.mubr.bf16.gmra.mxu0 %v423
        %v854 = vpop.f32.mrf.mxu0
        %v855 = vadd.f32 %v682, %v854
        %v856 = vpop.f32.mrf.mxu0
        %v857 = vpop.f32.mrf.mxu0
        %v858 = vpop.f32.mrf.mxu0
        %859 = vdwg.mxu0
        %v860 = vadd.f32 %v855, %v577
        %vm861 = vcmask 64512
        %v862 = vsel %vm861, %v771, -inf
        %863 = vmax.xlane.f32.xlu0 %v862
        %v864 = vpop.xlane.xlu0 %863
        %v865 = vsub.f32 %v771, %v864
        %v866 = vmul.f32 %v865, 1.442695
        %v867 = vpow.pop %v866
        %v868 = vsel %vm861, %v867, 0.0
        %869 = vadd.xlane.f32.xlu0 %v868
        %v870 = vpop.xlane.xlu0 %869
        %v871 = vrcp.pop %v870
        %v872 = vmul.f32 %v867, %v871
        %873 = vst.msk [vmem:[%s321] sm:$0xff] %vm861, %v872
        %v874 = vsel %vm861, %v860, -inf
        %875 = vmax.xlane.f32.xlu0 %v874
        %v876 = vpop.xlane.xlu0 %875
        %v877 = vsub.f32 %v860, %v876
        %v878 = vmul.f32 %v877, 1.442695
        %v879 = vpow.pop %v878
        %v880 = vsel %vm861, %v879, 0.0
        %881 = vadd.xlane.f32.xlu0 %v880
        %v882 = vpop.xlane.xlu0 %881
        %v883 = vrcp.pop %v882
        %v884 = vmul.f32 %v879, %v883
        %885 = vst.msk [vmem:[%s328] sm:$0xff] %vm861, %v884
        %s886 = sand.u32 %s175, 1
        %s887 = scalar_lea.sflag [#allocation3], %s886
        %s888 = sand.u32 %s175, 1
        %s889 = smul.addr %s888, 8
        %s890 = scalar_lea.vmem [#allocation2], %s889
        %s891 = sand.u32 %s203, 1
        %s892 = scalar_lea.sflag [#allocation5], %s891
        %s893 = sand.u32 %s203, 1
        %s894 = smul.addr %s893, 8
        %s895 = scalar_lea.vmem [#allocation4], %s894
        // Predicated region
        $region41: #{span_classifier_forward.1} parent=39 // pred_check
          %p896 = pneg %p185
        $region42: #{span_classifier_forward.1} parent=39 // pred_check_branch
          %898 = sbr.rel (%p896) target = $region44
        $region43: #{span_classifier_forward.1} parent=39 // pred_region
          %s900 = ssub.s32 128, 128
          %901 = vsyncadd %s887, %s900
          %s902 = sadd.s32 %s29, %s28
          %s903 = smul.addr %s902, 128
          %s904 = scalar_lea.hbm %s5, %s903
          %s906 = sshll.u32 %s890, 4
          %s907 = int_to_ptr.vmem [resolvable:$true] %s906
          %909 = dma.vmem_to_hbm [thread:$0]  %s907, 128, %s904, %s887
        $region44: #{span_classifier_forward.1} parent=39 // pred_fallthru
          _
        // Predicated region
        $region45: #{span_classifier_forward.1} parent=39 // pred_check
          %p910 = pneg %p213
        $region46: #{span_classifier_forward.1} parent=39 // pred_check_branch
          %912 = sbr.rel (%p910) target = $region48
        $region47: #{span_classifier_forward.1} parent=39 // pred_region
          %s914 = ssub.s32 128, 128
          %915 = vsyncadd %s892, %s914
          %s916 = sadd.s32 %s29, %s28
          %s917 = smul.addr %s916, 128
          %s918 = scalar_lea.hbm %s6, %s917
          %s920 = sshll.u32 %s895, 4
          %s921 = int_to_ptr.vmem [resolvable:$true] %s920
          %923 = dma.vmem_to_hbm [thread:$0]  %s921, 128, %s918, %s892
        $region48: #{span_classifier_forward.1} parent=39 // pred_fallthru
          _
      $region40: #{span_classifier_forward.1} parent=5 // pred_fallthru
        _
      %p924 = scmp.le.s32.totalorder 2, %s19
      // Predicated region
      $region49: #{span_classifier_forward.1} parent=5 // pred_check
        %p925 = pneg %p924
      $region50: #{span_classifier_forward.1} parent=5 // pred_check_branch
        %927 = sbr.rel (%p925) target = $region52
      $region51: #{span_classifier_forward.1} parent=5 // pred_region
        %s928 = ssub.s32 %s19, 2
        // Predicated region
        $region53: #{span_classifier_forward.1} parent=51 // pred_check
          %p929 = pneg %p191
        $region54: #{span_classifier_forward.1} parent=51 // pred_check_branch
          %931 = sbr.rel (%p929) target = $region56
        $region55: #{span_classifier_forward.1} parent=51 // pred_region
          %s932 = sand.u32 %s176, 1
          %s933 = scalar_lea.sflag [#allocation3], %s932
          %s934 = sand.u32 %s176, 1
          %s935 = smul.addr %s934, 8
          %s936 = scalar_lea.vmem [#allocation2], %s935
          %937 = dma.done %s933, 128
        $region56: #{span_classifier_forward.1} parent=51 // pred_fallthru
          _
        // Predicated region
        $region57: #{span_classifier_forward.1} parent=51 // pred_check
          %p938 = pneg %p219
        $region58: #{span_classifier_forward.1} parent=51 // pred_check_branch
          %940 = sbr.rel (%p938) target = $region60
        $region59: #{span_classifier_forward.1} parent=51 // pred_region
          %s941 = sand.u32 %s204, 1
          %s942 = scalar_lea.sflag [#allocation5], %s941
          %s943 = sand.u32 %s204, 1
          %s944 = smul.addr %s943, 8
          %s945 = scalar_lea.vmem [#allocation4], %s944
          %946 = dma.done %s942, 128
        $region60: #{span_classifier_forward.1} parent=51 // pred_fallthru
          _
      $region52: #{span_classifier_forward.1} parent=5 // pred_fallthru
        _
    $region6: #{span_classifier_forward.1} parent=1 // loop_footer
      %s23 = sadd.s32 1, %s19
    $region7: #{span_classifier_forward.1} parent=1 // loop_footer_branch
      %18 = sbr.rel target = $region3
    $region8: #{span_classifier_forward.1} parent=1 // loop_exit
      _
    %947 = vsyncpa [#allocation3], 1
    %s948 = scalar_lea.sflag [#allocation3], 1
    %949 = vsyncpa %s948, 1
    %950 = vsyncpa [#allocation5], 1
    %s951 = scalar_lea.sflag [#allocation5], 1
    %952 = vsyncpa %s951, 1

</llo_original>
